<compile_context>
chip_gen: v7x
topology: tpu7x:2x2x1
jax: 0.10.0
libtpu: 0.0.40
codegen_flags: <defaults>
</compile_context>

<pallas_src>
import math

import jax
import jax.numpy as jnp
from jax.experimental import pallas as pl
from jax.experimental.pallas import tpu as pltpu


# ------------------------------- Pallas kernel ------------------------------ #

def _critic_kernel(x_ref, w1_ref, b1_ref, w2_ref, b2_ref, w3_ref, b3_ref,
                   w4_ref, b4_ref, g_ref, o_ref):
    """One lane tile (TILE_BN = TILE_B * N tokens) per grid step.

    x_ref : [IN, TILE_BN]      feature-major; token (b, n) sits on lane b*N + n
    W's   : PyTorch-native [out, in] in the MXU compute dtype; b's: [out, 1] f32
    w4_ref: [H3, 1] f32 column;  b4_ref: [1, 1] f32
    g_ref : [TILE_BN, TILE_BN] f32 block-diag group matrix (1 iff same batch elem)
    o_ref : [1, TILE_BN]       softmax over each group of N agent lanes
    """
    x = x_ref[...]

    # Layers 1-3: MXU matmuls with f32 accumulation; bias + ReLU in f32 (VPU).
    h = jnp.dot(w1_ref[...], x, preferred_element_type=jnp.float32) + b1_ref[...]
    h = jnp.maximum(h, 0.0)
    h = jnp.dot(w2_ref[...], h.astype(w2_ref.dtype),
                preferred_element_type=jnp.float32) + b2_ref[...]
    h = jnp.maximum(h, 0.0)
    h = jnp.dot(w3_ref[...], h.astype(w3_ref.dtype),
                preferred_element_type=jnp.float32) + b3_ref[...]
    h = jnp.maximum(h, 0.0)

    # Layer 4 as VPU multiply + sublane reduction -> lane-dense [1, TILE_BN] Q row
    # (avoids a degenerate 1-column MXU matmul and any narrow store).
    q = jnp.sum(h * w4_ref[...], axis=0, keepdims=True) + b4_ref[...]

    # Softmax over each group of N agent lanes.  Subtracting the tile-wide max is
    # exact (softmax shift invariance) and keeps exp() <= 1; the per-group sums
    # come from a single small matmul with the block-diagonal G.  Exact divide.
    m = jnp.max(q, axis=1, keepdims=True)
    e = jnp.exp(q - m)
    s = jnp.dot(e, g_ref[...], preferred_element_type=jnp.float32)
    o_ref[...] = (e / s).astype(o_ref.dtype)


# ------------------------------ Python wrapper ------------------------------ #

def _choose_tile_bn(B, N, target_lanes):
    """Lane-tile width: the whole problem if small, else a group-aligned multiple of 128."""
    bn = B * N
    if bn <= target_lanes:
        return bn                                   # one step; block == full array dims
    quantum = N * 128 // math.gcd(N, 128)           # lane-dense AND softmax-group aligned
    return max(quantum, (target_lanes // quantum) * quantum)


def maddpg_critic_forward(state, action, params, *, compute_dtype=jnp.float32,
                          target_lanes=512):
    """state: [B, N, obs], action: [B, N, act] -> softmax(Q) over agents: [B, N, 1].

    compute_dtype: MXU operand dtype (bf16 recommended on v6e/v7x; accumulation,
    biases, ReLU and softmax stay f32).  target_lanes: ~512 on v6e/v7x, 128 on v5e.
    """
    w1, b1, w2, b2, w3, b3, w4, b4 = params          # PyTorch layout: W [out,in], b [out]
    B, N, obs = state.shape
    act = action.shape[-1]
    IN = obs + act
    H1, H2, H3 = w1.shape[0], w2.shape[0], w3.shape[0]

    BN = B * N
    tile_bn = _choose_tile_bn(B, N, target_lanes)
    bn_pad = ((BN + tile_bn - 1) // tile_bn) * tile_bn
    num_tiles = bn_pad // tile_bn

    # Pack tokens feature-major: reproduces torch.cat(dim=2) and puts (b, n) on
    # the lane axis (lane index = b*N + n).  Padding columns form whole dummy
    # groups (tile_bn % N == 0), so they never contaminate a real softmax group.
    x = jnp.concatenate([state, action], axis=2).reshape(BN, IN).T      # [IN, BN]
    if bn_pad != BN:
        x = jnp.pad(x, ((0, 0), (0, bn_pad - BN)))
    x = x.astype(compute_dtype)

    # Parameters in kernel layout.  Only MXU operands use compute_dtype.
    w1c = w1.astype(compute_dtype)
    w2c = w2.astype(compute_dtype)
    w3c = w3.astype(compute_dtype)
    b1c = b1.reshape(H1, 1).astype(jnp.float32)
    b2c = b2.reshape(H2, 1).astype(jnp.float32)
    b3c = b3.reshape(H3, 1).astype(jnp.float32)
    w4c = w4.reshape(H3, 1).astype(jnp.float32)      # [1, H3] -> [H3, 1] column
    b4c = b4.reshape(1, 1).astype(jnp.float32)

    # Block-diagonal group-membership matrix for the per-batch-element softmax.
    gid = jnp.arange(tile_bn, dtype=jnp.int32) // N
    gmat = (gid[:, None] == gid[None, :]).astype(jnp.float32)           # [tile_bn, tile_bn]

    flops = 2 * bn_pad * (IN * H1 + H1 * H2 + H2 * H3 + H3 + tile_bn)
    param_bytes = sum(int(p.size) * p.dtype.itemsize
                      for p in (w1c, b1c, w2c, b2c, w3c, b3c, w4c, b4c, gmat))
    bytes_accessed = int(x.size) * x.dtype.itemsize + 4 * bn_pad + param_bytes
    cost = pl.CostEstimate(flops=int(flops), transcendentals=int(bn_pad),
                           bytes_accessed=int(bytes_accessed))

    resident = lambda j: (0, 0)          # weights/biases/G: same block every step
    grid_spec = pltpu.PrefetchScalarGridSpec(
        num_scalar_prefetch=0,
        grid=(num_tiles,),
        in_specs=[
            pl.BlockSpec((IN, tile_bn), lambda j: (0, j)),     # packed activations
            pl.BlockSpec((H1, IN), resident),                  # W1 (cat'd, un-split)
            pl.BlockSpec((H1, 1), resident),                   # b1
            pl.BlockSpec((H2, H1), resident),                  # W2
            pl.BlockSpec((H2, 1), resident),                   # b2
            pl.BlockSpec((H3, H2), resident),                  # W3
            pl.BlockSpec((H3, 1), resident),                   # b3
            pl.BlockSpec((H3, 1), resident),                   # w4 (column)
            pl.BlockSpec((1, 1), resident),                    # b4
            pl.BlockSpec((tile_bn, tile_bn), resident),        # softmax group matrix
        ],
        out_specs=pl.BlockSpec((1, tile_bn), lambda j: (0, j)),
    )

    out = pl.pallas_call(
        _critic_kernel,
        out_shape=jax.ShapeDtypeStruct((1, bn_pad), jnp.float32),
        grid_spec=grid_spec,
        compiler_params=pltpu.CompilerParams(
            dimension_semantics=("parallel",),
            # Let XLA fuse the concat/transpose repack into the call's activation
            # read instead of materializing an extra HBM pass.
            allow_input_fusion=[True] + [False] * 9,
        ),
        cost_estimate=cost,
    )(x, w1c, b1c, w2c, b2c, w3c, b3c, w4c, b4c, gmat)

    # Lane c = b*N + n, so dropping padding and reshaping is order-preserving.
    return out[0, :BN].reshape(B, N, 1)


# ----------------------------- pure-JAX reference ---------------------------- #

def _reference(state, action, params):
    w1, b1, w2, b2, w3, b3, w4, b4 = params
    x = jnp.concatenate([state, action], axis=2)
    h = jax.nn.relu(x @ w1.T + b1)
    h = jax.nn.relu(h @ w2.T + b2)
    h = jax.nn.relu(h @ w3.T + b3)
    q = h @ w4.T + b4                                  # [B, N, 1]
    return jax.nn.softmax(q, axis=1)                   # softmax over agents


# ------------------------- deterministic parameters ------------------------- #

def make_params(full_obs_size, n_actions_agents, key):
    """PyTorch nn.Linear default init U(-1/sqrt(fan_in), +); native [out, in] / [out]."""
    dims = [full_obs_size + n_actions_agents, 202, 60, 30, 1]
    keys = jax.random.split(key, 4)

    def init_linear(k, fan_in, fan_out):
        kw, kb = jax.random.split(k)
        bound = 1.0 / float(fan_in) ** 0.5
        w = jax.random.uniform(kw, (fan_out, fan_in), jnp.float32, -bound, bound)
        b = jax.random.uniform(kb, (fan_out,), jnp.float32, -bound, bound)
        return w, b

    params = []
    for i in range(4):
        params.extend(init_linear(keys[i], dims[i], dims[i + 1]))
    return tuple(params)


# ----------------------------------- main ------------------------------------ #

if __name__ == "__main__":
    B, N = 2, 4                        # batch, agents
    full_obs_size = 24
    n_actions_agents = 6

    key = jax.random.PRNGKey(0)
    k_state, k_action, k_params = jax.random.split(key, 3)
    state = jax.random.normal(k_state, (B, N, full_obs_size), jnp.float32)
    action = jax.random.normal(k_action, (B, N, n_actions_agents), jnp.float32)
    params = make_params(full_obs_size, n_actions_agents, k_params)

    ref = _reference(state, action, params)

    # f32 MXU operands: numerical parity with the PyTorch/XLA reference
    # (observed error ~1e-6; bound kept loose only for MXU f32-emulation variation).
    fwd_f32 = jax.jit(lambda s, a, p: maddpg_critic_forward(
        s, a, p, compute_dtype=jnp.float32))
    out_f32 = jax.block_until_ready(fwd_f32(state, action, params))
    assert out_f32.shape == (B, N, 1), out_f32.shape
    assert jnp.allclose(out_f32, ref, atol=1e-3, rtol=1e-3), "f32 mismatch vs reference"

    # bf16 MXU operands (recommended on v6e/v7x); f32 accumulation/bias/softmax.
    fwd_bf16 = jax.jit(lambda s, a, p: maddpg_critic_forward(
        s, a, p, compute_dtype=jnp.bfloat16))
    out_bf16 = jax.block_until_ready(fwd_bf16(state, action, params))
    assert jnp.allclose(out_bf16, ref, atol=2e-2, rtol=2e-2), "bf16 mismatch vs reference"

    print("KERNEL_OK")
</pallas_src>

<mosaic_0001>
module attributes {stable_mosaic.version = 11 : i64} {
  func.func @_critic_kernel(%arg0: i32, %arg1: memref<30x8xf32, #tpu.memory_space<vmem>>, %arg2: memref<202x30xf32, #tpu.memory_space<vmem>>, %arg3: memref<202x1xf32, #tpu.memory_space<vmem>>, %arg4: memref<60x202xf32, #tpu.memory_space<vmem>>, %arg5: memref<60x1xf32, #tpu.memory_space<vmem>>, %arg6: memref<30x60xf32, #tpu.memory_space<vmem>>, %arg7: memref<30x1xf32, #tpu.memory_space<vmem>>, %arg8: memref<30x1xf32, #tpu.memory_space<vmem>>, %arg9: memref<1x1xf32, #tpu.memory_space<vmem>>, %arg10: memref<8x8xf32, #tpu.memory_space<vmem>>, %arg11: memref<1x8xf32, #tpu.memory_space<vmem>>) attributes {dimension_semantics = [#tpu.dimension_semantics<parallel>], iteration_bounds = array<i64: 1>, scalar_prefetch = 0 : i64, scratch_operands = 0 : i64, tpu.core_type = #tpu.core_type<tc>, window_params = [{transform_indices = @transform_0, window_bounds = array<i64: 30, 8>}, {pipeline_mode = #tpu.pipeline_mode<synchronous>, transform_indices = @transform_1, window_bounds = array<i64: 202, 30>}, {pipeline_mode = #tpu.pipeline_mode<synchronous>, transform_indices = @transform_2, window_bounds = array<i64: 202, 1>}, {pipeline_mode = #tpu.pipeline_mode<synchronous>, transform_indices = @transform_3, window_bounds = array<i64: 60, 202>}, {pipeline_mode = #tpu.pipeline_mode<synchronous>, transform_indices = @transform_4, window_bounds = array<i64: 60, 1>}, {pipeline_mode = #tpu.pipeline_mode<synchronous>, transform_indices = @transform_5, window_bounds = array<i64: 30, 60>}, {pipeline_mode = #tpu.pipeline_mode<synchronous>, transform_indices = @transform_6, window_bounds = array<i64: 30, 1>}, {pipeline_mode = #tpu.pipeline_mode<synchronous>, transform_indices = @transform_7, window_bounds = array<i64: 30, 1>}, {pipeline_mode = #tpu.pipeline_mode<synchronous>, transform_indices = @transform_8, window_bounds = array<i64: 1, 1>}, {pipeline_mode = #tpu.pipeline_mode<synchronous>, transform_indices = @transform_9, window_bounds = array<i64: 8, 8>}, {transform_indices = @transform_10, window_bounds = array<i64: 1, 8>}]} {
    %c0 = arith.constant 0 : index
    %c0_0 = arith.constant 0 : index
    %0 = vector.load %arg1[%c0, %c0_0] : memref<30x8xf32, #tpu.memory_space<vmem>>, vector<30x8xf32>
    %c0_1 = arith.constant 0 : index
    %c0_2 = arith.constant 0 : index
    %1 = vector.load %arg2[%c0_1, %c0_2] : memref<202x30xf32, #tpu.memory_space<vmem>>, vector<202x30xf32>
    %cst = arith.constant dense<0.000000e+00> : vector<202x8xf32>
    %2 = tpu.matmul %1, %0, %cst {dimension_numbers = #tpu.dot_dimension_numbers<[1], [0], [0], [1], [0, 0, 1, 1], [], []>} : vector<202x30xf32>, vector<30x8xf32>, vector<202x8xf32> -> vector<202x8xf32>
    %c0_3 = arith.constant 0 : index
    %c0_4 = arith.constant 0 : index
    %3 = vector.load %arg3[%c0_3, %c0_4] : memref<202x1xf32, #tpu.memory_space<vmem>>, vector<202x1xf32>
    %4 = vector.broadcast %3 : vector<202x1xf32> to vector<202x8xf32>
    %5 = arith.addf %2, %4 : vector<202x8xf32>
    %cst_5 = arith.constant 0.000000e+00 : f32
    %6 = vector.broadcast %cst_5 : f32 to vector<202x8xf32>
    %7 = arith.maximumf %5, %6 : vector<202x8xf32>
    %c0_6 = arith.constant 0 : index
    %c0_7 = arith.constant 0 : index
    %8 = vector.load %arg4[%c0_6, %c0_7] : memref<60x202xf32, #tpu.memory_space<vmem>>, vector<60x202xf32>
    %cst_8 = arith.constant dense<0.000000e+00> : vector<60x8xf32>
    %9 = tpu.matmul %8, %7, %cst_8 {dimension_numbers = #tpu.dot_dimension_numbers<[1], [0], [0], [1], [0, 0, 1, 1], [], []>} : vector<60x202xf32>, vector<202x8xf32>, vector<60x8xf32> -> vector<60x8xf32>
    %c0_9 = arith.constant 0 : index
    %c0_10 = arith.constant 0 : index
    %10 = vector.load %arg5[%c0_9, %c0_10] : memref<60x1xf32, #tpu.memory_space<vmem>>, vector<60x1xf32>
    %11 = vector.broadcast %10 : vector<60x1xf32> to vector<60x8xf32>
    %12 = arith.addf %9, %11 : vector<60x8xf32>
    %cst_11 = arith.constant 0.000000e+00 : f32
    %13 = vector.broadcast %cst_11 : f32 to vector<60x8xf32>
    %14 = arith.maximumf %12, %13 : vector<60x8xf32>
    %c0_12 = arith.constant 0 : index
    %c0_13 = arith.constant 0 : index
    %15 = vector.load %arg6[%c0_12, %c0_13] : memref<30x60xf32, #tpu.memory_space<vmem>>, vector<30x60xf32>
    %cst_14 = arith.constant dense<0.000000e+00> : vector<30x8xf32>
    %16 = tpu.matmul %15, %14, %cst_14 {dimension_numbers = #tpu.dot_dimension_numbers<[1], [0], [0], [1], [0, 0, 1, 1], [], []>} : vector<30x60xf32>, vector<60x8xf32>, vector<30x8xf32> -> vector<30x8xf32>
    %c0_15 = arith.constant 0 : index
    %c0_16 = arith.constant 0 : index
    %17 = vector.load %arg7[%c0_15, %c0_16] : memref<30x1xf32, #tpu.memory_space<vmem>>, vector<30x1xf32>
    %18 = vector.broadcast %17 : vector<30x1xf32> to vector<30x8xf32>
    %19 = arith.addf %16, %18 : vector<30x8xf32>
    %cst_17 = arith.constant 0.000000e+00 : f32
    %20 = vector.broadcast %cst_17 : f32 to vector<30x8xf32>
    %21 = arith.maximumf %19, %20 : vector<30x8xf32>
    %c0_18 = arith.constant 0 : index
    %c0_19 = arith.constant 0 : index
    %22 = vector.load %arg8[%c0_18, %c0_19] : memref<30x1xf32, #tpu.memory_space<vmem>>, vector<30x1xf32>
    %23 = vector.broadcast %22 : vector<30x1xf32> to vector<30x8xf32>
    %24 = arith.mulf %21, %23 : vector<30x8xf32>
    %cst_20 = arith.constant dense<0.000000e+00> : vector<8xf32>
    %25 = vector.multi_reduction <add>, %24, %cst_20 [0] : vector<30x8xf32> to vector<8xf32>
    %26 = vector.shape_cast %25 : vector<8xf32> to vector<1x8xf32>
    %c0_21 = arith.constant 0 : index
    %c0_22 = arith.constant 0 : index
    %27 = vector.load %arg9[%c0_21, %c0_22] : memref<1x1xf32, #tpu.memory_space<vmem>>, vector<1x1xf32>
    %28 = vector.broadcast %27 : vector<1x1xf32> to vector<1x8xf32>
    %29 = arith.addf %26, %28 : vector<1x8xf32>
    %cst_23 = arith.constant dense<0xFF800000> : vector<1xf32>
    %30 = vector.multi_reduction <maximumf>, %29, %cst_23 [1] : vector<1x8xf32> to vector<1xf32>
    %31 = vector.shape_cast %30 : vector<1xf32> to vector<1x1xf32>
    %32 = vector.broadcast %31 : vector<1x1xf32> to vector<1x8xf32>
    %33 = arith.subf %29, %32 : vector<1x8xf32>
    %34 = math.exp %33 : vector<1x8xf32>
    %c0_24 = arith.constant 0 : index
    %c0_25 = arith.constant 0 : index
    %35 = vector.load %arg10[%c0_24, %c0_25] : memref<8x8xf32, #tpu.memory_space<vmem>>, vector<8x8xf32>
    %cst_26 = arith.constant dense<0.000000e+00> : vector<1x8xf32>
    %36 = tpu.matmul %34, %35, %cst_26 {dimension_numbers = #tpu.dot_dimension_numbers<[1], [0], [0], [1], [0, 0, 1, 1], [], []>} : vector<1x8xf32>, vector<8x8xf32>, vector<1x8xf32> -> vector<1x8xf32>
    %37 = arith.divf %34, %36 : vector<1x8xf32>
    %c0_27 = arith.constant 0 : index
    %c0_28 = arith.constant 0 : index
    %38 = vector.load %arg11[%c0_27, %c0_28] : memref<1x8xf32, #tpu.memory_space<vmem>>, vector<1x8xf32>
    tpu.vector_store %arg11[%c0_27, %c0_28], %37 {strides = array<i32>} : memref<1x8xf32, #tpu.memory_space<vmem>>, vector<1x8xf32>,
    return
  }
  func.func @transform_0(%arg0: i32) -> (i32, i32) {
    %c0_i32 = arith.constant 0 : i32
    %c0_i32_0 = arith.constant 0 : i32
    return %c0_i32, %arg0 : i32, i32
  }
  func.func @transform_1(%arg0: i32) -> (i32, i32) {
    %c0_i32 = arith.constant 0 : i32
    %c0_i32_0 = arith.constant 0 : i32
    %c0_i32_1 = arith.constant 0 : i32
    return %c0_i32, %c0_i32_0 : i32, i32
  }
  func.func @transform_2(%arg0: i32) -> (i32, i32) {
    %c0_i32 = arith.constant 0 : i32
    %c0_i32_0 = arith.constant 0 : i32
    %c0_i32_1 = arith.constant 0 : i32
    return %c0_i32, %c0_i32_0 : i32, i32
  }
  func.func @transform_3(%arg0: i32) -> (i32, i32) {
    %c0_i32 = arith.constant 0 : i32
    %c0_i32_0 = arith.constant 0 : i32
    %c0_i32_1 = arith.constant 0 : i32
    return %c0_i32, %c0_i32_0 : i32, i32
  }
  func.func @transform_4(%arg0: i32) -> (i32, i32) {
    %c0_i32 = arith.constant 0 : i32
    %c0_i32_0 = arith.constant 0 : i32
    %c0_i32_1 = arith.constant 0 : i32
    return %c0_i32, %c0_i32_0 : i32, i32
  }
  func.func @transform_5(%arg0: i32) -> (i32, i32) {
    %c0_i32 = arith.constant 0 : i32
    %c0_i32_0 = arith.constant 0 : i32
    %c0_i32_1 = arith.constant 0 : i32
    return %c0_i32, %c0_i32_0 : i32, i32
  }
  func.func @transform_6(%arg0: i32) -> (i32, i32) {
    %c0_i32 = arith.constant 0 : i32
    %c0_i32_0 = arith.constant 0 : i32
    %c0_i32_1 = arith.constant 0 : i32
    return %c0_i32, %c0_i32_0 : i32, i32
  }
  func.func @transform_7(%arg0: i32) -> (i32, i32) {
    %c0_i32 = arith.constant 0 : i32
    %c0_i32_0 = arith.constant 0 : i32
    %c0_i32_1 = arith.constant 0 : i32
    return %c0_i32, %c0_i32_0 : i32, i32
  }
  func.func @transform_8(%arg0: i32) -> (i32, i32) {
    %c0_i32 = arith.constant 0 : i32
    %c0_i32_0 = arith.constant 0 : i32
    %c0_i32_1 = arith.constant 0 : i32
    return %c0_i32, %c0_i32_0 : i32, i32
  }
  func.func @transform_9(%arg0: i32) -> (i32, i32) {
    %c0_i32 = arith.constant 0 : i32
    %c0_i32_0 = arith.constant 0 : i32
    %c0_i32_1 = arith.constant 0 : i32
    return %c0_i32, %c0_i32_0 : i32, i32
  }
  func.func @transform_10(%arg0: i32) -> (i32, i32) {
    %c0_i32 = arith.constant 0 : i32
    %c0_i32_0 = arith.constant 0 : i32
    return %c0_i32, %arg0 : i32, i32
  }
}

</mosaic_0001>

<llo_original>
// kernel: squeeze.1
$region0: #{squeeze.1}
  %s0 = inlined_call_operand.vmem [shape: f32[8], index: 0, kind: input, shape index: {}]
  %s1 = inlined_call_operand.hbm [shape: f32[2,4,1], index: 1, kind: output, shape index: {}]
  $region1: #{squeeze.1} parent=0
    #allocation0 [shape = 'u8[1024]{0}', space=vmem, size = 0x400, scoped, tag = 'operand span for operand 1']
    #allocation1 [shape = 's32[1]{0}', space=sflag, size = 0x4, scoped, tag = 'scoped memory for squeeze.1']
    #allocation2 [shape = 'u8[4096]{0}', space=vmem, size = 0x1000, scoped, tag = 'scoped mem for output reshape']
    #allocation3 [shape = 'u8[4096]{0}', space=vmem, size = 0x1000, scoped, tag = 'scoped mem for input reshape']
    %2 = vsyncpa [#allocation1], 0
    %s4 = sshllo.u32 0, 1
    %v5 = vld [vmem:[%s0] sm:%s4]
    %6 = vst [vmem:[#allocation3] sm:%s4] %v5
    %v7 = vld [vmem:[#allocation3] sm:$0x1]
    %vm8 = vcmask 31744
    %9 = vst.msk [vmem:[#allocation2] sm:$0x1] %vm8, %v7
    %v10 = vld [vmem:[#allocation3] sm:$0x1]
    %11 = vrot.lane.b32.xlu0 %v10, 124
    %v12 = vpop.permute.xlu0 %11
    %vm13 = vcmask 31744
    %s14 = scalar_lea.vmem [#allocation2], 1
    %15 = vst.msk [vmem:[%s14] sm:$0x1] %vm13, %v12
    %s17 = sshllo.u32 0, 2
    %v19 = vld [vmem:[#allocation2] sm:%s17]
    %s20 = sshllo.u32 0, 2
    %21 = vst [vmem:[#allocation0] sm:%s20] %v19
    %s23 = ssub.s32 32, 32
    %24 = vsyncadd [#allocation1], %s23
    %s26 = sshll.u32 [#allocation0], 4
    %s27 = int_to_ptr.vmem [resolvable:$true] %s26
    %29 = dma.vmem_to_hbm [thread:$0]  %s27, 32, %s1, [#allocation1]
    %30 = dma.done [#allocation1], 32
    %31 = vsyncpa [#allocation1], 1

// kernel: _lambda_.2
$region0: #{_lambda_.2}
  #allocation0 [shape = 'u32[]', space=smem, size = 0x4, offset = 0x4, fixed_abs, tag = 'smem constant byte address 0x4 - core index']
  #allocation1 [shape = 'u32[144,128]{1,0:T(1,128)}', space=vmem, size = 0x12000, scoped, tag = 'internal scratch']
  #allocation2 [shape = 'f32[1,1]{1,0:T(1,128)S(1)}', space=vmem, size = 0x200, scoped, tag = 'scoped memory for _lambda_.2']
  %s0 = inlined_call_operand.vmem [shape: f32[202,30], index: 0, kind: input, shape index: {}]
  %s1 = inlined_call_operand.vmem [shape: f32[202,1], index: 1, kind: input, shape index: {}]
  %s2 = inlined_call_operand.vmem [shape: f32[60,202], index: 2, kind: input, shape index: {}]
  %s3 = inlined_call_operand.vmem [shape: f32[60,1], index: 3, kind: input, shape index: {}]
  %s4 = inlined_call_operand.vmem [shape: f32[30,60], index: 4, kind: input, shape index: {}]
  %s5 = inlined_call_operand.vmem [shape: f32[30,1], index: 5, kind: input, shape index: {}]
  %s6 = inlined_call_operand.vmem [shape: f32[30,1], index: 6, kind: input, shape index: {}]
  %s7 = inlined_call_operand.<no memory space> [shape: f32[1,1], index: 7, kind: input, shape index: {}]
  %s8 = inlined_call_operand.vmem [shape: f32[8,8], index: 8, kind: input, shape index: {}]
  %s9 = inlined_call_operand.vmem [shape: f32[8,30], index: 9, kind: input, shape index: {}]
  %s10 = inlined_call_operand.vmem [shape: f32[1,8], index: 10, kind: output, shape index: {}]
  %s11 = sld [smem:[#allocation0]]
  $region50: #{_lambda_.2} parent=0
    _
  %s13 = ssub.s32 1, %s11
  %s14 = scalar_select 0, %s13, %s11
  %v15 = vstv %s7
  %16 = vst [vmem:[#allocation2] sm:$0x1] %v15
  $region1: #{_lambda_.2} parent=0
    #allocation3 [shape = 'u8[16384]{0}', space=vmem, size = 0x4000, dematerialized = true, scoped, tag = 'FusionAdapter Buffer %fusion.1 = f32[30,8]{1,0:T(8,128)} fusion(%param_9.1), kind=kLoop, calls=%fused_computation.1.clone, metadata={op_name="jit(<lambda>)/transpose" stack_frame_id=8}']
    // Predicated region
    $region2: #{_lambda_.2} parent=1 // pred_check
      _
    $region3: #{_lambda_.2} parent=1 // pred_check_branch
      %18 = sbr.rel (0) target = $region5
    $region4: #{_lambda_.2} parent=1 // pred_region
      _
    $region5: #{_lambda_.2} parent=1 // pred_fallthru
      _
    // Predicated region
    $region6: #{_lambda_.2} parent=1 // pred_check
      _
    $region7: #{_lambda_.2} parent=1 // pred_check_branch
      %20 = sbr.rel (0) target = $region9
    $region8: #{_lambda_.2} parent=1 // pred_region
      _
    $region9: #{_lambda_.2} parent=1 // pred_fallthru
      _
    // Predicated region
    $region10: #{_lambda_.2} parent=1 // pred_check
      _
    $region11: #{_lambda_.2} parent=1 // pred_check_branch
      %22 = sbr.rel (0) target = $region13
    $region12: #{_lambda_.2} parent=1 // pred_region
      _
    $region13: #{_lambda_.2} parent=1 // pred_fallthru
      _
    // Predicated region
    $region14: #{_lambda_.2} parent=1 // pred_check
      _
    $region15: #{_lambda_.2} parent=1 // pred_check_branch
      %24 = sbr.rel (0) target = $region17
    $region16: #{_lambda_.2} parent=1 // pred_region
      _
    $region17: #{_lambda_.2} parent=1 // pred_fallthru
      _
    // Predicated region
    $region18: #{_lambda_.2} parent=1 // pred_check
      _
    $region19: #{_lambda_.2} parent=1 // pred_check_branch
      %26 = sbr.rel (0) target = $region21
    $region20: #{_lambda_.2} parent=1 // pred_region
      _
    $region21: #{_lambda_.2} parent=1 // pred_fallthru
      _
    // Predicated region
    $region22: #{_lambda_.2} parent=1 // pred_check
      _
    $region23: #{_lambda_.2} parent=1 // pred_check_branch
      %28 = sbr.rel (0) target = $region25
    $region24: #{_lambda_.2} parent=1 // pred_region
      _
    $region25: #{_lambda_.2} parent=1 // pred_fallthru
      _
    // Predicated region
    $region26: #{_lambda_.2} parent=1 // pred_check
      _
    $region27: #{_lambda_.2} parent=1 // pred_check_branch
      %30 = sbr.rel (0) target = $region29
    $region28: #{_lambda_.2} parent=1 // pred_region
      _
    $region29: #{_lambda_.2} parent=1 // pred_fallthru
      _
    // Predicated region
    $region30: #{_lambda_.2} parent=1 // pred_check
      _
    $region31: #{_lambda_.2} parent=1 // pred_check_branch
      %32 = sbr.rel (0) target = $region33
    $region32: #{_lambda_.2} parent=1 // pred_region
      _
    $region33: #{_lambda_.2} parent=1 // pred_fallthru
      _
    // Predicated region
    $region34: #{_lambda_.2} parent=1 // pred_check
      _
    $region35: #{_lambda_.2} parent=1 // pred_check_branch
      %34 = sbr.rel (0) target = $region37
    $region36: #{_lambda_.2} parent=1 // pred_region
      _
    $region37: #{_lambda_.2} parent=1 // pred_fallthru
      _
    // Predicated region
    $region38: #{_lambda_.2} parent=1 // pred_check
      _
    $region39: #{_lambda_.2} parent=1 // pred_check_branch
      %36 = sbr.rel (0) target = $region41
    $region40: #{_lambda_.2} parent=1 // pred_region
      _
    $region41: #{_lambda_.2} parent=1 // pred_fallthru
      _
    %v37 = vld [vmem:[%s9] sm:$0xff]
    %39 = vst [vmem:[#allocation3] sm:$0xff] %v37
    %s40 = scalar_lea.vmem %s9, 8
    %v41 = vld [vmem:[%s40] sm:$0xff]
    %s42 = scalar_lea.vmem [#allocation3], 8
    %44 = vst [vmem:[%s42] sm:$0xff] %v41
    %s45 = scalar_lea.vmem %s9, 16
    %v46 = vld [vmem:[%s45] sm:$0xff]
    %s47 = scalar_lea.vmem [#allocation3], 16
    %49 = vst [vmem:[%s47] sm:$0xff] %v46
    %s50 = scalar_lea.vmem %s9, 24
    %v51 = vld [vmem:[%s50] sm:$0xff]
    %s52 = scalar_lea.vmem [#allocation3], 24
    %54 = vst [vmem:[%s52] sm:$0xff] %v51
    %v55 = vld [vmem:[#allocation3] sm:$0xff]
    %v56 = vld [vmem:[#allocation3 + $0x8] sm:$0xff]
    %v57 = vld [vmem:[#allocation3 + $0x10] sm:$0xff]
    %v58 = vld [vmem:[#allocation3 + $0x18] sm:$0x3f]
    %v59 = vld [vmem:[%s0] sm:$0xff]
    %v60 = vld [vmem:[%s0 + $0x8] sm:$0xff]
    %v61 = vld [vmem:[%s0 + $0x10] sm:$0xff]
    %v62 = vld [vmem:[%s0 + $0x18] sm:$0xff]
    %v63 = vld [vmem:[%s0 + $0x20] sm:$0xff]
    %v64 = vld [vmem:[%s0 + $0x28] sm:$0xff]
    %v65 = vld [vmem:[%s0 + $0x30] sm:$0xff]
    %v66 = vld [vmem:[%s0 + $0x38] sm:$0xff]
    %v67 = vld [vmem:[%s0 + $0x40] sm:$0xff]
    %v68 = vld [vmem:[%s0 + $0x48] sm:$0xff]
    %v69 = vld [vmem:[%s0 + $0x50] sm:$0xff]
    %v70 = vld [vmem:[%s0 + $0x58] sm:$0xff]
    %v71 = vld [vmem:[%s0 + $0x60] sm:$0xff]
    %v72 = vld [vmem:[%s0 + $0x68] sm:$0xff]
    %v73 = vld [vmem:[%s0 + $0x70] sm:$0xff]
    %v74 = vld [vmem:[%s0 + $0x78] sm:$0xff]
    %v75 = vld [vmem:[%s0 + $0x80] sm:$0xff]
    %v76 = vld [vmem:[%s0 + $0x88] sm:$0xff]
    %v77 = vld [vmem:[%s0 + $0x90] sm:$0xff]
    %v78 = vld [vmem:[%s0 + $0x98] sm:$0xff]
    %v79 = vld [vmem:[%s0 + $0xa0] sm:$0xff]
    %v80 = vld [vmem:[%s0 + $0xa8] sm:$0xff]
    %v81 = vld [vmem:[%s0 + $0xb0] sm:$0xff]
    %v82 = vld [vmem:[%s0 + $0xb8] sm:$0xff]
    %v83 = vld [vmem:[%s0 + $0xc0] sm:$0xff]
    %v84 = vld [vmem:[%s0 + $0xc8] sm:$0x3]
    %v85 = vld [vmem:[%s1] sm:$0xff]
    %v86 = vld [vmem:[%s1 + $0x8] sm:$0xff]
    %v87 = vld [vmem:[%s1 + $0x10] sm:$0xff]
    %v88 = vld [vmem:[%s1 + $0x18] sm:$0xff]
    %v89 = vld [vmem:[%s1 + $0x20] sm:$0xff]
    %v90 = vld [vmem:[%s1 + $0x28] sm:$0xff]
    %v91 = vld [vmem:[%s1 + $0x30] sm:$0xff]
    %v92 = vld [vmem:[%s1 + $0x38] sm:$0xff]
    %v93 = vld [vmem:[%s1 + $0x40] sm:$0xff]
    %v94 = vld [vmem:[%s1 + $0x48] sm:$0xff]
    %v95 = vld [vmem:[%s1 + $0x50] sm:$0xff]
    %v96 = vld [vmem:[%s1 + $0x58] sm:$0xff]
    %v97 = vld [vmem:[%s1 + $0x60] sm:$0xff]
    %v98 = vld [vmem:[%s1 + $0x68] sm:$0xff]
    %v99 = vld [vmem:[%s1 + $0x70] sm:$0xff]
    %v100 = vld [vmem:[%s1 + $0x78] sm:$0xff]
    %v101 = vld [vmem:[%s1 + $0x80] sm:$0xff]
    %v102 = vld [vmem:[%s1 + $0x88] sm:$0xff]
    %v103 = vld [vmem:[%s1 + $0x90] sm:$0xff]
    %v104 = vld [vmem:[%s1 + $0x98] sm:$0xff]
    %v105 = vld [vmem:[%s1 + $0xa0] sm:$0xff]
    %v106 = vld [vmem:[%s1 + $0xa8] sm:$0xff]
    %v107 = vld [vmem:[%s1 + $0xb0] sm:$0xff]
    %v108 = vld [vmem:[%s1 + $0xb8] sm:$0xff]
    %v109 = vld [vmem:[%s1 + $0xc0] sm:$0xff]
    %v110 = vld [vmem:[%s1 + $0xc8] sm:$0x3]
    %112 = vset.pattern.permute.xlu0 0
    %113 = vperm.xlu0 %112, %v85
    %v114 = vpop.permute.xlu0 %113
    %117 = vset.pattern.permute.xlu0 0
    %118 = vperm.xlu0 %117, %v86
    %v119 = vpop.permute.xlu0 %118
    %122 = vset.pattern.permute.xlu0 0
    %123 = vperm.xlu0 %122, %v87
    %v124 = vpop.permute.xlu0 %123
    %127 = vset.pattern.permute.xlu0 0
    %128 = vperm.xlu0 %127, %v88
    %v129 = vpop.permute.xlu0 %128
    %132 = vset.pattern.permute.xlu0 0
    %133 = vperm.xlu0 %132, %v89
    %v134 = vpop.permute.xlu0 %133
    %137 = vset.pattern.permute.xlu0 0
    %138 = vperm.xlu0 %137, %v90
    %v139 = vpop.permute.xlu0 %138
    %142 = vset.pattern.permute.xlu0 0
    %143 = vperm.xlu0 %142, %v91
    %v144 = vpop.permute.xlu0 %143
    %147 = vset.pattern.permute.xlu0 0
    %148 = vperm.xlu0 %147, %v92
    %v149 = vpop.permute.xlu0 %148
    %152 = vset.pattern.permute.xlu0 0
    %153 = vperm.xlu0 %152, %v93
    %v154 = vpop.permute.xlu0 %153
    %157 = vset.pattern.permute.xlu0 0
    %158 = vperm.xlu0 %157, %v94
    %v159 = vpop.permute.xlu0 %158
    %162 = vset.pattern.permute.xlu0 0
    %163 = vperm.xlu0 %162, %v95
    %v164 = vpop.permute.xlu0 %163
    %167 = vset.pattern.permute.xlu0 0
    %168 = vperm.xlu0 %167, %v96
    %v169 = vpop.permute.xlu0 %168
    %172 = vset.pattern.permute.xlu0 0
    %173 = vperm.xlu0 %172, %v97
    %v174 = vpop.permute.xlu0 %173
    %177 = vset.pattern.permute.xlu0 0
    %178 = vperm.xlu0 %177, %v98
    %v179 = vpop.permute.xlu0 %178
    %182 = vset.pattern.permute.xlu0 0
    %183 = vperm.xlu0 %182, %v99
    %v184 = vpop.permute.xlu0 %183
    %187 = vset.pattern.permute.xlu0 0
    %188 = vperm.xlu0 %187, %v100
    %v189 = vpop.permute.xlu0 %188
    %192 = vset.pattern.permute.xlu0 0
    %193 = vperm.xlu0 %192, %v101
    %v194 = vpop.permute.xlu0 %193
    %197 = vset.pattern.permute.xlu0 0
    %198 = vperm.xlu0 %197, %v102
    %v199 = vpop.permute.xlu0 %198
    %202 = vset.pattern.permute.xlu0 0
    %203 = vperm.xlu0 %202, %v103
    %v204 = vpop.permute.xlu0 %203
    %207 = vset.pattern.permute.xlu0 0
    %208 = vperm.xlu0 %207, %v104
    %v209 = vpop.permute.xlu0 %208
    %212 = vset.pattern.permute.xlu0 0
    %213 = vperm.xlu0 %212, %v105
    %v214 = vpop.permute.xlu0 %213
    %217 = vset.pattern.permute.xlu0 0
    %218 = vperm.xlu0 %217, %v106
    %v219 = vpop.permute.xlu0 %218
    %222 = vset.pattern.permute.xlu0 0
    %223 = vperm.xlu0 %222, %v107
    %v224 = vpop.permute.xlu0 %223
    %227 = vset.pattern.permute.xlu0 0
    %228 = vperm.xlu0 %227, %v108
    %v229 = vpop.permute.xlu0 %228
    %232 = vset.pattern.permute.xlu0 0
    %233 = vperm.xlu0 %232, %v109
    %v234 = vpop.permute.xlu0 %233
    %237 = vset.pattern.permute.xlu0 0
    %238 = vperm.xlu0 %237, %v110
    %v239 = vpop.permute.xlu0 %238
    %vm241 = vcmask 244736
    %v243 = vsel %vm241, %v59, 0
    %v246 = vsel %vm241, %v60, 0
    %v249 = vsel %vm241, %v61, 0
    %v252 = vsel %vm241, %v62, 0
    %v255 = vsel %vm241, %v63, 0
    %v258 = vsel %vm241, %v64, 0
    %v261 = vsel %vm241, %v65, 0
    %v264 = vsel %vm241, %v66, 0
    %v267 = vsel %vm241, %v67, 0
    %v270 = vsel %vm241, %v68, 0
    %v273 = vsel %vm241, %v69, 0
    %v276 = vsel %vm241, %v70, 0
    %v279 = vsel %vm241, %v71, 0
    %v282 = vsel %vm241, %v72, 0
    %v285 = vsel %vm241, %v73, 0
    %v288 = vsel %vm241, %v74, 0
    %v291 = vsel %vm241, %v75, 0
    %v294 = vsel %vm241, %v76, 0
    %v297 = vsel %vm241, %v77, 0
    %v300 = vsel %vm241, %v78, 0
    %v303 = vsel %vm241, %v79, 0
    %v306 = vsel %vm241, %v80, 0
    %v309 = vsel %vm241, %v81, 0
    %v312 = vsel %vm241, %v82, 0
    %v315 = vsel %vm241, %v83, 0
    %v318 = vsel %vm241, %v84, 0
    %vm320 = vcmask 1045504
    %v322 = vsel %vm320, %v58, 0
    %324 = vmatprep.subr.mxu0 0.0
    %325 = vmatpush1.msra.mxu0 %v55
    %326 = vmatprep.subr.mxu0 0.0
    %327 = vmatpush1.msra.mxu0 %v56
    %328 = vmatprep.subr.mxu0 0.0
    %329 = vmatpush1.msra.mxu0 %v57
    %330 = vmatprep.subr.mxu0 0.0
    %331 = vmatpush1.msra.mxu0 %v322
    %332 = vmatprep.subr.mxu0 0.0
    %333 = vmatpush1.msra.mxu0 0.0
    %334 = vmatprep.subr.mxu0 0.0
    %335 = vmatpush1.msra.mxu0 0.0
    %336 = vmatprep.subr.mxu0 0.0
    %337 = vmatpush1.msra.mxu0 0.0
    %338 = vmatprep.subr.mxu0 0.0
    %339 = vmatpush1.msra.mxu0 0.0
    %340 = vmatprep.subr.mxu0 0.0
    %341 = vmatpush1.msra.mxu0 0.0
    %342 = vmatprep.subr.mxu0 0.0
    %343 = vmatpush1.msra.mxu0 0.0
    %344 = vmatprep.subr.mxu0 0.0
    %345 = vmatpush1.msra.mxu0 0.0
    %346 = vmatprep.subr.mxu0 0.0
    %347 = vmatpush1.msra.mxu0 0.0
    %348 = vmatprep.subr.mxu0 0.0
    %349 = vmatpush1.msra.mxu0 0.0
    %350 = vmatprep.subr.mxu0 0.0
    %351 = vmatpush1.msra.mxu0 0.0
    %352 = vmatprep.subr.mxu0 0.0
    %353 = vmatpush1.msra.mxu0 0.0
    %354 = vmatprep.subr.mxu0 0.0
    %355 = vmatpush1.msra.mxu0 0.0
    %356 = vmatprep.subr.mxu0 0.0
    %357 = vmatpush1.msra.mxu0 0.0
    %358 = vmatprep.subr.mxu0 0.0
    %359 = vmatpush1.msra.mxu0 0.0
    %360 = vmatprep.subr.mxu0 0.0
    %361 = vmatpush1.msra.mxu0 0.0
    %362 = vmatprep.subr.mxu0 0.0
    %363 = vmatpush1.msra.mxu0 0.0
    %364 = vmatprep.subr.mxu0 0.0
    %365 = vmatpush1.msra.mxu0 0.0
    %366 = vmatprep.subr.mxu0 0.0
    %367 = vmatpush1.msra.mxu0 0.0
    %368 = vmatprep.subr.mxu0 0.0
    %369 = vmatpush1.msra.mxu0 0.0
    %370 = vmatprep.subr.mxu0 0.0
    %371 = vmatpush1.msra.mxu0 0.0
    %372 = vmatprep.subr.mxu0 0.0
    %373 = vmatpush1.msra.mxu0 0.0
    %374 = vmatprep.subr.mxu0 0.0
    %375 = vmatpush1.msra.mxu0 0.0
    %376 = vmatprep.subr.mxu0 0.0
    %377 = vmatpush1.msra.mxu0 0.0
    %378 = vmatprep.subr.mxu0 0.0
    %379 = vmatpush1.msra.mxu0 0.0
    %380 = vmatprep.subr.mxu0 0.0
    %381 = vmatpush1.msra.mxu0 0.0
    %382 = vmatprep.subr.mxu0 0.0
    %383 = vmatpush1.msra.mxu0 0.0
    %384 = vmatprep.subr.mxu0 0.0
    %385 = vmatpush1.msra.mxu0 0.0
    %386 = vmatprep.subr.mxu0 0.0
    %387 = vmatpush1.msra.mxu0 0.0
    %388 = vmatprep.mubr.f32.mxu0 0.0
    %389 = vmatmul.mubr.f32.gmra.mrb[0].mxu0 %v243
    %v390 = vpop.f32.mrb[0].mxu0
    %v391 = vadd.f32 %v114, %v390
    %v392 = vpop.f32.mrb[0].mxu0
    %393 = vmatprep.mubr.f32.mxu0 0.0
    %394 = vmatmul.mubr.f32.gmra.mrb[0].mxu0 %v246
    %v395 = vpop.f32.mrb[0].mxu0
    %v396 = vadd.f32 %v119, %v395
    %v397 = vpop.f32.mrb[0].mxu0
    %398 = vmatprep.mubr.f32.mxu0 0.0
    %399 = vmatmul.mubr.f32.gmra.mrb[0].mxu0 %v249
    %v400 = vpop.f32.mrb[0].mxu0
    %v401 = vadd.f32 %v124, %v400
    %v402 = vpop.f32.mrb[0].mxu0
    %403 = vmatprep.mubr.f32.mxu0 0.0
    %404 = vmatmul.mubr.f32.gmra.mrb[0].mxu0 %v252
    %v405 = vpop.f32.mrb[0].mxu0
    %v406 = vadd.f32 %v129, %v405
    %v407 = vpop.f32.mrb[0].mxu0
    %408 = vmatprep.mubr.f32.mxu0 0.0
    %409 = vmatmul.mubr.f32.gmra.mrb[0].mxu0 %v255
    %v410 = vpop.f32.mrb[0].mxu0
    %v411 = vadd.f32 %v134, %v410
    %v412 = vpop.f32.mrb[0].mxu0
    %413 = vmatprep.mubr.f32.mxu0 0.0
    %414 = vmatmul.mubr.f32.gmra.mrb[0].mxu0 %v258
    %v415 = vpop.f32.mrb[0].mxu0
    %v416 = vadd.f32 %v139, %v415
    %v417 = vpop.f32.mrb[0].mxu0
    %418 = vmatprep.mubr.f32.mxu0 0.0
    %419 = vmatmul.mubr.f32.gmra.mrb[0].mxu0 %v261
    %v420 = vpop.f32.mrb[0].mxu0
    %v421 = vadd.f32 %v144, %v420
    %v422 = vpop.f32.mrb[0].mxu0
    %423 = vmatprep.mubr.f32.mxu0 0.0
    %424 = vmatmul.mubr.f32.gmra.mrb[0].mxu0 %v264
    %v425 = vpop.f32.mrb[0].mxu0
    %v426 = vadd.f32 %v149, %v425
    %v427 = vpop.f32.mrb[0].mxu0
    %428 = vmatprep.mubr.f32.mxu0 0.0
    %429 = vmatmul.mubr.f32.gmra.mrb[0].mxu0 %v267
    %v430 = vpop.f32.mrb[0].mxu0
    %v431 = vadd.f32 %v154, %v430
    %v432 = vpop.f32.mrb[0].mxu0
    %433 = vmatprep.mubr.f32.mxu0 0.0
    %434 = vmatmul.mubr.f32.gmra.mrb[0].mxu0 %v270
    %v435 = vpop.f32.mrb[0].mxu0
    %v436 = vadd.f32 %v159, %v435
    %v437 = vpop.f32.mrb[0].mxu0
    %438 = vmatprep.mubr.f32.mxu0 0.0
    %439 = vmatmul.mubr.f32.gmra.mrb[0].mxu0 %v273
    %v440 = vpop.f32.mrb[0].mxu0
    %v441 = vadd.f32 %v164, %v440
    %v442 = vpop.f32.mrb[0].mxu0
    %443 = vmatprep.mubr.f32.mxu0 0.0
    %444 = vmatmul.mubr.f32.gmra.mrb[0].mxu0 %v276
    %v445 = vpop.f32.mrb[0].mxu0
    %v446 = vadd.f32 %v169, %v445
    %v447 = vpop.f32.mrb[0].mxu0
    %448 = vmatprep.mubr.f32.mxu0 0.0
    %449 = vmatmul.mubr.f32.gmra.mrb[0].mxu0 %v279
    %v450 = vpop.f32.mrb[0].mxu0
    %v451 = vadd.f32 %v174, %v450
    %v452 = vpop.f32.mrb[0].mxu0
    %453 = vmatprep.mubr.f32.mxu0 0.0
    %454 = vmatmul.mubr.f32.gmra.mrb[0].mxu0 %v282
    %v455 = vpop.f32.mrb[0].mxu0
    %v456 = vadd.f32 %v179, %v455
    %v457 = vpop.f32.mrb[0].mxu0
    %458 = vmatprep.mubr.f32.mxu0 0.0
    %459 = vmatmul.mubr.f32.gmra.mrb[0].mxu0 %v285
    %v460 = vpop.f32.mrb[0].mxu0
    %v461 = vadd.f32 %v184, %v460
    %v462 = vpop.f32.mrb[0].mxu0
    %463 = vmatprep.mubr.f32.mxu0 0.0
    %464 = vmatmul.mubr.f32.gmra.mrb[0].mxu0 %v288
    %v465 = vpop.f32.mrb[0].mxu0
    %v466 = vadd.f32 %v189, %v465
    %v467 = vpop.f32.mrb[0].mxu0
    %468 = vmatprep.mubr.f32.mxu0 0.0
    %469 = vmatmul.mubr.f32.gmra.mrb[0].mxu0 %v291
    %v470 = vpop.f32.mrb[0].mxu0
    %v471 = vadd.f32 %v194, %v470
    %v472 = vpop.f32.mrb[0].mxu0
    %473 = vmatprep.mubr.f32.mxu0 0.0
    %474 = vmatmul.mubr.f32.gmra.mrb[0].mxu0 %v294
    %v475 = vpop.f32.mrb[0].mxu0
    %v476 = vadd.f32 %v199, %v475
    %v477 = vpop.f32.mrb[0].mxu0
    %478 = vmatprep.mubr.f32.mxu0 0.0
    %479 = vmatmul.mubr.f32.gmra.mrb[0].mxu0 %v297
    %v480 = vpop.f32.mrb[0].mxu0
    %v481 = vadd.f32 %v204, %v480
    %v482 = vpop.f32.mrb[0].mxu0
    %483 = vmatprep.mubr.f32.mxu0 0.0
    %484 = vmatmul.mubr.f32.gmra.mrb[0].mxu0 %v300
    %v485 = vpop.f32.mrb[0].mxu0
    %v486 = vadd.f32 %v209, %v485
    %v487 = vpop.f32.mrb[0].mxu0
    %488 = vmatprep.mubr.f32.mxu0 0.0
    %489 = vmatmul.mubr.f32.gmra.mrb[0].mxu0 %v303
    %v490 = vpop.f32.mrb[0].mxu0
    %v491 = vadd.f32 %v214, %v490
    %v492 = vpop.f32.mrb[0].mxu0
    %493 = vmatprep.mubr.f32.mxu0 0.0
    %494 = vmatmul.mubr.f32.gmra.mrb[0].mxu0 %v306
    %v495 = vpop.f32.mrb[0].mxu0
    %v496 = vadd.f32 %v219, %v495
    %v497 = vpop.f32.mrb[0].mxu0
    %498 = vmatprep.mubr.f32.mxu0 0.0
    %499 = vmatmul.mubr.f32.gmra.mrb[0].mxu0 %v309
    %v500 = vpop.f32.mrb[0].mxu0
    %v501 = vadd.f32 %v224, %v500
    %v502 = vpop.f32.mrb[0].mxu0
    %503 = vmatprep.mubr.f32.mxu0 0.0
    %504 = vmatmul.mubr.f32.gmra.mrb[0].mxu0 %v312
    %v505 = vpop.f32.mrb[0].mxu0
    %v506 = vadd.f32 %v229, %v505
    %v507 = vpop.f32.mrb[0].mxu0
    %508 = vmatprep.mubr.f32.mxu0 0.0
    %509 = vmatmul.mubr.f32.gmra.mrb[0].mxu0 %v315
    %v510 = vpop.f32.mrb[0].mxu0
    %v511 = vadd.f32 %v234, %v510
    %v512 = vpop.f32.mrb[0].mxu0
    %513 = vmatprep.mubr.f32.mxu0 0.0
    %514 = vmatmul.mubr.f32.gmra.mrb[0].mxu0 %v318
    %v515 = vpop.f32.mrb[0].mxu0
    %v516 = vadd.f32 %v239, %v515
    %v517 = vpop.f32.mrb[0].mxu0
    %518 = vdwg.mxu0
    %v519 = vmax.f32 %v391, 0.0
    %v520 = vmax.f32 %v396, 0.0
    %v521 = vmax.f32 %v401, 0.0
    %v522 = vmax.f32 %v406, 0.0
    %v523 = vmax.f32 %v411, 0.0
    %v524 = vmax.f32 %v416, 0.0
    %v525 = vmax.f32 %v421, 0.0
    %v526 = vmax.f32 %v426, 0.0
    %v527 = vmax.f32 %v431, 0.0
    %v528 = vmax.f32 %v436, 0.0
    %v529 = vmax.f32 %v441, 0.0
    %v530 = vmax.f32 %v446, 0.0
    %v531 = vmax.f32 %v451, 0.0
    %v532 = vmax.f32 %v456, 0.0
    %v533 = vmax.f32 %v461, 0.0
    %v534 = vmax.f32 %v466, 0.0
    %v535 = vmax.f32 %v471, 0.0
    %v536 = vmax.f32 %v476, 0.0
    %v537 = vmax.f32 %v481, 0.0
    %v538 = vmax.f32 %v486, 0.0
    %v539 = vmax.f32 %v491, 0.0
    %v540 = vmax.f32 %v496, 0.0
    %v541 = vmax.f32 %v501, 0.0
    %v542 = vmax.f32 %v506, 0.0
    %v543 = vmax.f32 %v511, 0.0
    %v544 = vmax.f32 %v516, 0.0
    %v545 = vld [vmem:[%s2] sm:$0xff]
    %v546 = vld [vmem:[%s2 + $0x8] sm:$0xff]
    %v547 = vld [vmem:[%s2 + $0x10] sm:$0xff]
    %v548 = vld [vmem:[%s2 + $0x18] sm:$0xff]
    %v549 = vld [vmem:[%s2 + $0x20] sm:$0xff]
    %v550 = vld [vmem:[%s2 + $0x28] sm:$0xff]
    %v551 = vld [vmem:[%s2 + $0x30] sm:$0xff]
    %v552 = vld [vmem:[%s2 + $0x38] sm:$0xff]
    %v553 = vld [vmem:[%s2 + $0x40] sm:$0xff]
    %v554 = vld [vmem:[%s2 + $0x48] sm:$0xff]
    %v555 = vld [vmem:[%s2 + $0x50] sm:$0xff]
    %v556 = vld [vmem:[%s2 + $0x58] sm:$0xff]
    %v557 = vld [vmem:[%s2 + $0x60] sm:$0xff]
    %v558 = vld [vmem:[%s2 + $0x68] sm:$0xff]
    %v559 = vld [vmem:[%s2 + $0x70] sm:$0xf]
    %v560 = vld [vmem:[%s2 + $0x78] sm:$0xf]
    %v561 = vld [vmem:[%s3] sm:$0xff]
    %v562 = vld [vmem:[%s3 + $0x8] sm:$0xff]
    %v563 = vld [vmem:[%s3 + $0x10] sm:$0xff]
    %v564 = vld [vmem:[%s3 + $0x18] sm:$0xff]
    %v565 = vld [vmem:[%s3 + $0x20] sm:$0xff]
    %v566 = vld [vmem:[%s3 + $0x28] sm:$0xff]
    %v567 = vld [vmem:[%s3 + $0x30] sm:$0xff]
    %v568 = vld [vmem:[%s3 + $0x38] sm:$0xf]
    %570 = vset.pattern.permute.xlu0 0
    %571 = vperm.xlu0 %570, %v561
    %v572 = vpop.permute.xlu0 %571
    %575 = vset.pattern.permute.xlu0 0
    %576 = vperm.xlu0 %575, %v562
    %v577 = vpop.permute.xlu0 %576
    %580 = vset.pattern.permute.xlu0 0
    %581 = vperm.xlu0 %580, %v563
    %v582 = vpop.permute.xlu0 %581
    %585 = vset.pattern.permute.xlu0 0
    %586 = vperm.xlu0 %585, %v564
    %v587 = vpop.permute.xlu0 %586
    %590 = vset.pattern.permute.xlu0 0
    %591 = vperm.xlu0 %590, %v565
    %v592 = vpop.permute.xlu0 %591
    %595 = vset.pattern.permute.xlu0 0
    %596 = vperm.xlu0 %595, %v566
    %v597 = vpop.permute.xlu0 %596
    %600 = vset.pattern.permute.xlu0 0
    %601 = vperm.xlu0 %600, %v567
    %v602 = vpop.permute.xlu0 %601
    %605 = vset.pattern.permute.xlu0 0
    %606 = vperm.xlu0 %605, %v568
    %v607 = vpop.permute.xlu0 %606
    %vm609 = vcmask 605184
    %v611 = vsel %vm609, %v546, 0
    %v614 = vsel %vm609, %v548, 0
    %v617 = vsel %vm609, %v550, 0
    %v620 = vsel %vm609, %v552, 0
    %v623 = vsel %vm609, %v554, 0
    %v626 = vsel %vm609, %v556, 0
    %v629 = vsel %vm609, %v558, 0
    %v632 = vsel %vm609, %v560, 0
    %vm634 = vcmask 1041408
    %v636 = vsel %vm634, %v544, 0
    %638 = vmatprep.subr.mxu0 0.0
    %639 = vmatpush1.msra.mxu0 %v519
    %640 = vmatprep.subr.mxu0 0.0
    %641 = vmatpush1.msra.mxu0 %v520
    %642 = vmatprep.subr.mxu0 0.0
    %643 = vmatpush1.msra.mxu0 %v521
    %644 = vmatprep.subr.mxu0 0.0
    %645 = vmatpush1.msra.mxu0 %v522
    %646 = vmatprep.subr.mxu0 0.0
    %647 = vmatpush1.msra.mxu0 %v523
    %648 = vmatprep.subr.mxu0 0.0
    %649 = vmatpush1.msra.mxu0 %v524
    %650 = vmatprep.subr.mxu0 0.0
    %651 = vmatpush1.msra.mxu0 %v525
    %652 = vmatprep.subr.mxu0 0.0
    %653 = vmatpush1.msra.mxu0 %v526
    %654 = vmatprep.subr.mxu0 0.0
    %655 = vmatpush1.msra.mxu0 %v527
    %656 = vmatprep.subr.mxu0 0.0
    %657 = vmatpush1.msra.mxu0 %v528
    %658 = vmatprep.subr.mxu0 0.0
    %659 = vmatpush1.msra.mxu0 %v529
    %660 = vmatprep.subr.mxu0 0.0
    %661 = vmatpush1.msra.mxu0 %v530
    %662 = vmatprep.subr.mxu0 0.0
    %663 = vmatpush1.msra.mxu0 %v531
    %664 = vmatprep.subr.mxu0 0.0
    %665 = vmatpush1.msra.mxu0 %v532
    %666 = vmatprep.subr.mxu0 0.0
    %667 = vmatpush1.msra.mxu0 %v533
    %668 = vmatprep.subr.mxu0 0.0
    %669 = vmatpush1.msra.mxu0 %v534
    %670 = vmatprep.subr.mxu0 0.0
    %671 = vmatpush1.msra.mxu0 %v535
    %672 = vmatprep.subr.mxu0 0.0
    %673 = vmatpush1.msra.mxu0 %v536
    %674 = vmatprep.subr.mxu0 0.0
    %675 = vmatpush1.msra.mxu0 %v537
    %676 = vmatprep.subr.mxu0 0.0
    %677 = vmatpush1.msra.mxu0 %v538
    %678 = vmatprep.subr.mxu0 0.0
    %679 = vmatpush1.msra.mxu0 %v539
    %680 = vmatprep.subr.mxu0 0.0
    %681 = vmatpush1.msra.mxu0 %v540
    %682 = vmatprep.subr.mxu0 0.0
    %683 = vmatpush1.msra.mxu0 %v541
    %684 = vmatprep.subr.mxu0 0.0
    %685 = vmatpush1.msra.mxu0 %v542
    %686 = vmatprep.subr.mxu0 0.0
    %687 = vmatpush1.msra.mxu0 %v543
    %688 = vmatprep.subr.mxu0 0.0
    %689 = vmatpush1.msra.mxu0 %v636
    %690 = vmatprep.subr.mxu0 0.0
    %691 = vmatpush1.msra.mxu0 0.0
    %692 = vmatprep.subr.mxu0 0.0
    %693 = vmatpush1.msra.mxu0 0.0
    %694 = vmatprep.subr.mxu0 0.0
    %695 = vmatpush1.msra.mxu0 0.0
    %696 = vmatprep.subr.mxu0 0.0
    %697 = vmatpush1.msra.mxu0 0.0
    %698 = vmatprep.subr.mxu0 0.0
    %699 = vmatpush1.msra.mxu0 0.0
    %700 = vmatprep.subr.mxu0 0.0
    %701 = vmatpush1.msra.mxu0 0.0
    %702 = vmatprep.mubr.f32.mxu0 %v611
    %703 = vmatmul.mubr.f32.gmra.mrb[0].mxu0 %v545
    %v704 = vpop.f32.mrb[0].mxu0
    %v705 = vadd.f32 %v572, %v704
    %v706 = vpop.f32.mrb[0].mxu0
    %707 = vmatprep.mubr.f32.mxu0 %v614
    %708 = vmatmul.mubr.f32.gmra.mrb[0].mxu0 %v547
    %v709 = vpop.f32.mrb[0].mxu0
    %v710 = vadd.f32 %v577, %v709
    %v711 = vpop.f32.mrb[0].mxu0
    %712 = vmatprep.mubr.f32.mxu0 %v617
    %713 = vmatmul.mubr.f32.gmra.mrb[0].mxu0 %v549
    %v714 = vpop.f32.mrb[0].mxu0
    %v715 = vadd.f32 %v582, %v714
    %v716 = vpop.f32.mrb[0].mxu0
    %717 = vmatprep.mubr.f32.mxu0 %v620
    %718 = vmatmul.mubr.f32.gmra.mrb[0].mxu0 %v551
    %v719 = vpop.f32.mrb[0].mxu0
    %v720 = vadd.f32 %v587, %v719
    %v721 = vpop.f32.mrb[0].mxu0
    %722 = vmatprep.mubr.f32.mxu0 %v623
    %723 = vmatmul.mubr.f32.gmra.mrb[0].mxu0 %v553
    %v724 = vpop.f32.mrb[0].mxu0
    %v725 = vadd.f32 %v592, %v724
    %v726 = vpop.f32.mrb[0].mxu0
    %727 = vmatprep.mubr.f32.mxu0 %v626
    %728 = vmatmul.mubr.f32.gmra.mrb[0].mxu0 %v555
    %v729 = vpop.f32.mrb[0].mxu0
    %v730 = vadd.f32 %v597, %v729
    %v731 = vpop.f32.mrb[0].mxu0
    %732 = vmatprep.mubr.f32.mxu0 %v629
    %733 = vmatmul.mubr.f32.gmra.mrb[0].mxu0 %v557
    %v734 = vpop.f32.mrb[0].mxu0
    %v735 = vadd.f32 %v602, %v734
    %v736 = vpop.f32.mrb[0].mxu0
    %737 = vmatprep.mubr.f32.mxu0 %v632
    %738 = vmatmul.mubr.f32.gmra.mrb[0].mxu0 %v559
    %v739 = vpop.f32.mrb[0].mxu0
    %v740 = vadd.f32 %v607, %v739
    %v741 = vpop.f32.mrb[0].mxu0
    %742 = vdwg.mxu0
    %v743 = vmax.f32 %v705, 0.0
    %v744 = vmax.f32 %v710, 0.0
    %v745 = vmax.f32 %v715, 0.0
    %v746 = vmax.f32 %v720, 0.0
    %v747 = vmax.f32 %v725, 0.0
    %v748 = vmax.f32 %v730, 0.0
    %v749 = vmax.f32 %v735, 0.0
    %v750 = vmax.f32 %v740, 0.0
    %v751 = vld [vmem:[%s4] sm:$0xff]
    %v752 = vld [vmem:[%s4 + $0x8] sm:$0xff]
    %v753 = vld [vmem:[%s4 + $0x10] sm:$0xff]
    %v754 = vld [vmem:[%s4 + $0x18] sm:$0x3f]
    %v755 = vld [vmem:[%s5] sm:$0xff]
    %v756 = vld [vmem:[%s5 + $0x8] sm:$0xff]
    %v757 = vld [vmem:[%s5 + $0x10] sm:$0xff]
    %v758 = vld [vmem:[%s5 + $0x18] sm:$0x3f]
    %760 = vset.pattern.permute.xlu0 0
    %761 = vperm.xlu0 %760, %v755
    %v762 = vpop.permute.xlu0 %761
    %765 = vset.pattern.permute.xlu0 0
    %766 = vperm.xlu0 %765, %v756
    %v767 = vpop.permute.xlu0 %766
    %770 = vset.pattern.permute.xlu0 0
    %771 = vperm.xlu0 %770, %v757
    %v772 = vpop.permute.xlu0 %771
    %775 = vset.pattern.permute.xlu0 0
    %776 = vperm.xlu0 %775, %v758
    %v777 = vpop.permute.xlu0 %776
    %vm779 = vcmask 490496
    %v781 = vsel %vm779, %v751, 0
    %v784 = vsel %vm779, %v752, 0
    %v787 = vsel %vm779, %v753, 0
    %v790 = vsel %vm779, %v754, 0
    %vm792 = vcmask 1043456
    %v794 = vsel %vm792, %v750, 0
    %796 = vmatprep.subr.mxu0 0.0
    %797 = vmatpush1.msra.mxu0 %v743
    %798 = vmatprep.subr.mxu0 0.0
    %799 = vmatpush1.msra.mxu0 %v744
    %800 = vmatprep.subr.mxu0 0.0
    %801 = vmatpush1.msra.mxu0 %v745
    %802 = vmatprep.subr.mxu0 0.0
    %803 = vmatpush1.msra.mxu0 %v746
    %804 = vmatprep.subr.mxu0 0.0
    %805 = vmatpush1.msra.mxu0 %v747
    %806 = vmatprep.subr.mxu0 0.0
    %807 = vmatpush1.msra.mxu0 %v748
    %808 = vmatprep.subr.mxu0 0.0
    %809 = vmatpush1.msra.mxu0 %v749
    %810 = vmatprep.subr.mxu0 0.0
    %811 = vmatpush1.msra.mxu0 %v794
    %812 = vmatprep.subr.mxu0 0.0
    %813 = vmatpush1.msra.mxu0 0.0
    %814 = vmatprep.subr.mxu0 0.0
    %815 = vmatpush1.msra.mxu0 0.0
    %816 = vmatprep.subr.mxu0 0.0
    %817 = vmatpush1.msra.mxu0 0.0
    %818 = vmatprep.subr.mxu0 0.0
    %819 = vmatpush1.msra.mxu0 0.0
    %820 = vmatprep.subr.mxu0 0.0
    %821 = vmatpush1.msra.mxu0 0.0
    %822 = vmatprep.subr.mxu0 0.0
    %823 = vmatpush1.msra.mxu0 0.0
    %824 = vmatprep.subr.mxu0 0.0
    %825 = vmatpush1.msra.mxu0 0.0
    %826 = vmatprep.subr.mxu0 0.0
    %827 = vmatpush1.msra.mxu0 0.0
    %828 = vmatprep.subr.mxu0 0.0
    %829 = vmatpush1.msra.mxu0 0.0
    %830 = vmatprep.subr.mxu0 0.0
    %831 = vmatpush1.msra.mxu0 0.0
    %832 = vmatprep.subr.mxu0 0.0
    %833 = vmatpush1.msra.mxu0 0.0
    %834 = vmatprep.subr.mxu0 0.0
    %835 = vmatpush1.msra.mxu0 0.0
    %836 = vmatprep.subr.mxu0 0.0
    %837 = vmatpush1.msra.mxu0 0.0
    %838 = vmatprep.subr.mxu0 0.0
    %839 = vmatpush1.msra.mxu0 0.0
    %840 = vmatprep.subr.mxu0 0.0
    %841 = vmatpush1.msra.mxu0 0.0
    %842 = vmatprep.subr.mxu0 0.0
    %843 = vmatpush1.msra.mxu0 0.0
    %844 = vmatprep.subr.mxu0 0.0
    %845 = vmatpush1.msra.mxu0 0.0
    %846 = vmatprep.subr.mxu0 0.0
    %847 = vmatpush1.msra.mxu0 0.0
    %848 = vmatprep.subr.mxu0 0.0
    %849 = vmatpush1.msra.mxu0 0.0
    %850 = vmatprep.subr.mxu0 0.0
    %851 = vmatpush1.msra.mxu0 0.0
    %852 = vmatprep.subr.mxu0 0.0
    %853 = vmatpush1.msra.mxu0 0.0
    %854 = vmatprep.subr.mxu0 0.0
    %855 = vmatpush1.msra.mxu0 0.0
    %856 = vmatprep.subr.mxu0 0.0
    %857 = vmatpush1.msra.mxu0 0.0
    %858 = vmatprep.subr.mxu0 0.0
    %859 = vmatpush1.msra.mxu0 0.0
    %860 = vmatprep.mubr.f32.mxu0 0.0
    %861 = vmatmul.mubr.f32.gmra.mrb[0].mxu0 %v781
    %v862 = vpop.f32.mrb[0].mxu0
    %v863 = vadd.f32 %v762, %v862
    %v864 = vpop.f32.mrb[0].mxu0
    %865 = vmatprep.mubr.f32.mxu0 0.0
    %866 = vmatmul.mubr.f32.gmra.mrb[0].mxu0 %v784
    %v867 = vpop.f32.mrb[0].mxu0
    %v868 = vadd.f32 %v767, %v867
    %v869 = vpop.f32.mrb[0].mxu0
    %870 = vmatprep.mubr.f32.mxu0 0.0
    %871 = vmatmul.mubr.f32.gmra.mrb[0].mxu0 %v787
    %v872 = vpop.f32.mrb[0].mxu0
    %v873 = vadd.f32 %v772, %v872
    %v874 = vpop.f32.mrb[0].mxu0
    %875 = vmatprep.mubr.f32.mxu0 0.0
    %876 = vmatmul.mubr.f32.gmra.mrb[0].mxu0 %v790
    %v877 = vpop.f32.mrb[0].mxu0
    %v878 = vadd.f32 %v777, %v877
    %v879 = vpop.f32.mrb[0].mxu0
    %880 = vdwg.mxu0
    %v881 = vmax.f32 %v863, 0.0
    %v882 = vmax.f32 %v868, 0.0
    %v883 = vmax.f32 %v873, 0.0
    %v884 = vmax.f32 %v878, 0.0
    %v885 = vld [vmem:[%s6] sm:$0xff]
    %v886 = vld [vmem:[%s6 + $0x8] sm:$0xff]
    %v887 = vld [vmem:[%s6 + $0x10] sm:$0xff]
    %v888 = vld [vmem:[%s6 + $0x18] sm:$0x3f]
    %890 = vset.pattern.permute.xlu0 0
    %891 = vperm.xlu0 %890, %v885
    %v892 = vpop.permute.xlu0 %891
    %895 = vset.pattern.permute.xlu0 0
    %896 = vperm.xlu0 %895, %v886
    %v897 = vpop.permute.xlu0 %896
    %900 = vset.pattern.permute.xlu0 0
    %901 = vperm.xlu0 %900, %v887
    %v902 = vpop.permute.xlu0 %901
    %905 = vset.pattern.permute.xlu0 0
    %906 = vperm.xlu0 %905, %v888
    %v907 = vpop.permute.xlu0 %906
    %v909 = vmul.f32 %v881, %v892
    %v910 = vmul.f32 %v882, %v897
    %v911 = vmul.f32 %v883, %v902
    %v912 = vmul.f32 %v884, %v907
    %vm913 = vcmask 64512
    %v914 = vsel %vm913, %v909, 0.0
    %v915 = vsel %vm913, %v910, 0.0
    %v916 = vadd.f32 %v914, %v915
    %v917 = vsel %vm913, %v911, 0.0
    %v918 = vadd.f32 %v916, %v917
    %vm919 = vcmask 62464
    %v920 = vsel %vm919, %v912, 0.0
    %v921 = vadd.f32 %v918, %v920
    %v922 = vrot.slane %v921, 4
    %v923 = vadd.f32 %v921, %v922
    %v924 = vrot.slane %v923, 2
    %v925 = vadd.f32 %v923, %v924
    %v926 = vrot.slane %v925, 1
    %v927 = vadd.f32 %v925, %v926
    %v928 = vld [vmem:[#allocation2] sm:$0x1]
    %930 = vset.pattern.permute.xlu0 0
    %931 = vperm.xlu0 %930, %v928
    %v932 = vpop.permute.xlu0 %931
    %v934 = vlaneseq
    %v935 = vshrl.u32 %v934, 7
    %v936 = vsub.s32 0, %v935
    %v937 = vrot.slane %v932, %v936
    %v938 = vadd.f32 %v927, %v937
    %v939 = vsel %vm913, %v938, -inf
    %940 = vmax.xlane.f32.xlu0 %v939
    %v941 = vpop.xlane.xlu0 %940
    %v942 = vsub.f32 %v938, %v941
    %v943 = vmul.f32 %v942, 1.442695
    %v944 = vpow.pop %v943
    %v945 = vld [vmem:[%s8] sm:$0xff]
    %v947 = vsel %vm913, %v944, 0
    %949 = vmatprep.subr.mxu0 0.0
    %950 = vmatpush1.msra.mxu0 %v945
    %951 = vmatprep.subr.mxu0 0.0
    %952 = vmatpush1.msra.mxu0 0.0
    %953 = vmatprep.subr.mxu0 0.0
    %954 = vmatpush1.msra.mxu0 0.0
    %955 = vmatprep.subr.mxu0 0.0
    %956 = vmatpush1.msra.mxu0 0.0
    %957 = vmatprep.subr.mxu0 0.0
    %958 = vmatpush1.msra.mxu0 0.0
    %959 = vmatprep.subr.mxu0 0.0
    %960 = vmatpush1.msra.mxu0 0.0
    %961 = vmatprep.subr.mxu0 0.0
    %962 = vmatpush1.msra.mxu0 0.0
    %963 = vmatprep.subr.mxu0 0.0
    %964 = vmatpush1.msra.mxu0 0.0
    %965 = vmatprep.subr.mxu0 0.0
    %966 = vmatpush1.msra.mxu0 0.0
    %967 = vmatprep.subr.mxu0 0.0
    %968 = vmatpush1.msra.mxu0 0.0
    %969 = vmatprep.subr.mxu0 0.0
    %970 = vmatpush1.msra.mxu0 0.0
    %971 = vmatprep.subr.mxu0 0.0
    %972 = vmatpush1.msra.mxu0 0.0
    %973 = vmatprep.subr.mxu0 0.0
    %974 = vmatpush1.msra.mxu0 0.0
    %975 = vmatprep.subr.mxu0 0.0
    %976 = vmatpush1.msra.mxu0 0.0
    %977 = vmatprep.subr.mxu0 0.0
    %978 = vmatpush1.msra.mxu0 0.0
    %979 = vmatprep.subr.mxu0 0.0
    %980 = vmatpush1.msra.mxu0 0.0
    %981 = vmatprep.subr.mxu0 0.0
    %982 = vmatpush1.msra.mxu0 0.0
    %983 = vmatprep.subr.mxu0 0.0
    %984 = vmatpush1.msra.mxu0 0.0
    %985 = vmatprep.subr.mxu0 0.0
    %986 = vmatpush1.msra.mxu0 0.0
    %987 = vmatprep.subr.mxu0 0.0
    %988 = vmatpush1.msra.mxu0 0.0
    %989 = vmatprep.subr.mxu0 0.0
    %990 = vmatpush1.msra.mxu0 0.0
    %991 = vmatprep.subr.mxu0 0.0
    %992 = vmatpush1.msra.mxu0 0.0
    %993 = vmatprep.subr.mxu0 0.0
    %994 = vmatpush1.msra.mxu0 0.0
    %995 = vmatprep.subr.mxu0 0.0
    %996 = vmatpush1.msra.mxu0 0.0
    %997 = vmatprep.subr.mxu0 0.0
    %998 = vmatpush1.msra.mxu0 0.0
    %999 = vmatprep.subr.mxu0 0.0
    %1000 = vmatpush1.msra.mxu0 0.0
    %1001 = vmatprep.subr.mxu0 0.0
    %1002 = vmatpush1.msra.mxu0 0.0
    %1003 = vmatprep.subr.mxu0 0.0
    %1004 = vmatpush1.msra.mxu0 0.0
    %1005 = vmatprep.subr.mxu0 0.0
    %1006 = vmatpush1.msra.mxu0 0.0
    %1007 = vmatprep.subr.mxu0 0.0
    %1008 = vmatpush1.msra.mxu0 0.0
    %1009 = vmatprep.subr.mxu0 0.0
    %1010 = vmatpush1.msra.mxu0 0.0
    %1011 = vmatprep.subr.mxu0 0.0
    %1012 = vmatpush1.msra.mxu0 0.0
    %1013 = vmatprep.mubr.f32.mxu0 0.0
    %1014 = vmatmul.mubr.f32.gmra.mrb[0].mxu0 %v947
    %v1015 = vpop.f32.mrb[0].mxu0
    %v1016 = vadd.f32 0.0, %v1015
    %v1017 = vpop.f32.mrb[0].mxu0
    %1018 = vdwg.mxu0
    %v1019 = vrcp.pop %v1016
    %v1020 = vmul.f32 %v944, %v1019
    %vm1021 = vcmask 57344
    %1022 = vst.msk [vmem:[%s10] sm:$0x1] %vm1021, %v1020
    // Predicated region
    $region42: #{_lambda_.2} parent=1 // pred_check
      _
    $region43: #{_lambda_.2} parent=1 // pred_check_branch
      %1024 = sbr.rel (0) target = $region45
    $region44: #{_lambda_.2} parent=1 // pred_region
      _
    $region45: #{_lambda_.2} parent=1 // pred_fallthru
      _
    // Predicated region
    $region46: #{_lambda_.2} parent=1 // pred_check
      _
    $region47: #{_lambda_.2} parent=1 // pred_check_branch
      %1026 = sbr.rel (0) target = $region49
    $region48: #{_lambda_.2} parent=1 // pred_region
      _
    $region49: #{_lambda_.2} parent=1 // pred_fallthru
      _

</llo_original>
